<compile_context>
chip_gen: v6e
topology: v6e:2x2x1
jax: 0.10.0
libtpu: 0.0.40
codegen_flags: <defaults>
</compile_context>

<pallas_src>
import functools

import jax
import jax.numpy as jnp
from jax.experimental import pallas as pl
from jax.experimental.pallas import tpu as pltpu


IN_PAD = 8  # fc1 input features padded to one f32 sublane group


def _round_up(n, m):
    return (n + m - 1) // m * m


@functools.lru_cache(maxsize=1)
def _epilogue_dtype():
    """bf16 bias/ReLU epilogue on chips with a bf16 VALU (v6e/v7x); f32 otherwise (v5e...)."""
    try:
        kind = jax.devices()[0].device_kind.lower()
    except Exception:
        return jnp.float32
    return jnp.bfloat16 if ("v6" in kind or "v7" in kind) else jnp.float32


# ---------------------------------------------------------------------------
# Kernel
# ---------------------------------------------------------------------------
def dqn_kernel(x_ref, w1_ref, wslab_ref, bias_ref, o_ref, *, epilogue_dtype):
    """One batch tile of the fused 4-layer MLP.

    x_ref:     [TB, 8]      bf16  (input features, zero-padded from in_features to 8)
    w1_ref:    [8, 256]     bf16  (fc1 weight, zero-padded rows)
    wslab_ref: [512, 128]   bf16  (rows   0:256 = fc2 [256,128],
                                   rows 256:384 = fc3 [128,128] (cols 64:128 zero),
                                   rows 384:512 = fc4 [128,128] (rows 64:128 & cols A:128 zero))
    bias_ref:  [8, 256]     f32   (row 0 = b1[256], row 1 = b2[128], row 2 = b3[64],
                                   row 3 = b4[num_actions]; all zero-padded)
    o_ref:     [TB, out_pad] f32  (cols 0:num_actions valid, rest zero)
    """
    ep = epilogue_dtype
    out_pad = o_ref.shape[1]

    bias_f32 = bias_ref[...]                      # [8, 256] f32, single load
    bias_ep = bias_f32.astype(ep)
    b1 = bias_ep[0:1, :]                          # [1, 256]
    b2 = bias_ep[1:2, :128]                       # [1, 128]
    b3 = bias_ep[2:3, :128]                       # [1, 128]
    b4 = bias_f32[3:4, :out_pad]                  # [1, out_pad] f32 (final layer stays f32)

    # fc1 + ReLU   (x already bf16; MXU bf16 matmul with f32 accumulation)
    h = jnp.dot(x_ref[...], w1_ref[...], preferred_element_type=jnp.float32)
    h = jnp.maximum(h.astype(ep) + b1, 0.0)                                  # [TB, 256] ep

    # fc2 + ReLU
    h = jnp.dot(h.astype(jnp.bfloat16), wslab_ref[pl.ds(0, 256), :],
                preferred_element_type=jnp.float32)
    h = jnp.maximum(h.astype(ep) + b2, 0.0)                                  # [TB, 128] ep

    # fc3 + ReLU   (weight cols 64:128 are zero -> those activation cols stay 0)
    h = jnp.dot(h.astype(jnp.bfloat16), wslab_ref[pl.ds(256, 128), :],
                preferred_element_type=jnp.float32)
    h = jnp.maximum(h.astype(ep) + b3, 0.0)                                  # [TB, 128] ep

    # fc4 (no activation); only the first out_pad columns are stored -> narrow HBM writeback
    h = jnp.dot(h.astype(jnp.bfloat16), wslab_ref[pl.ds(384, 128), :],
                preferred_element_type=jnp.float32)                          # [TB, 128] f32
    o_ref[...] = h[:, :out_pad] + b4


# ---------------------------------------------------------------------------
# Parameter packing (run ONCE per parameter set, outside the forward pass)
# ---------------------------------------------------------------------------
def pack_params(params):
    in_features = params["w1"].shape[0]
    num_actions = params["w4"].shape[1]
    assert in_features <= IN_PAD and num_actions <= 128

    # fc1 weight, padded to [8, 256], bf16
    w1 = jnp.zeros((IN_PAD, 256), jnp.float32).at[:in_features, :].set(params["w1"])
    w1 = w1.astype(jnp.bfloat16)

    # fc2/fc3/fc4 packed into one [512, 128] bf16 slab (one DMA, VMEM-resident)
    wslab = jnp.zeros((512, 128), jnp.float32)
    wslab = wslab.at[0:256, :128].set(params["w2"])            # [256,128]
    wslab = wslab.at[256:384, :64].set(params["w3"])           # [128, 64] -> cols 64:128 zero
    wslab = wslab.at[384:448, :num_actions].set(params["w4"])  # [ 64,  A] -> rest zero
    wslab = wslab.astype(jnp.bfloat16)

    # All biases in one f32 [8, 256] slab (cast to the epilogue dtype inside the kernel)
    bslab = jnp.zeros((8, 256), jnp.float32)
    bslab = bslab.at[0, :256].set(params["b1"].reshape(-1))
    bslab = bslab.at[1, :128].set(params["b2"].reshape(-1))
    bslab = bslab.at[2, :64].set(params["b3"].reshape(-1))
    bslab = bslab.at[3, :num_actions].set(params["b4"].reshape(-1))

    return w1, wslab, bslab


# ---------------------------------------------------------------------------
# Forward wrapper (takes packed params; padding/casts fuse under jit)
# ---------------------------------------------------------------------------
@functools.partial(jax.jit, static_argnames=("num_actions", "block_batch"))
def dqn_forward(x, w1p, wslab, bslab, *, num_actions=4, block_batch=2048):
    """x: [B, in_features] (any float dtype). Returns [B, num_actions] f32."""
    B, in_features = x.shape
    assert in_features <= IN_PAD
    out_pad = max(8, _round_up(num_actions, 8))
    assert out_pad <= 128

    ep = _epilogue_dtype()

    # Batch tile: multiple of 16 (bf16 sublane packing), large enough to amortize the
    # ~0.35 us per-grid-step overhead, and split into >= 2 steps so the "parallel" batch
    # axis keeps both v7x TensorCores busy (also overlaps DMA/compute on v5e/v6e).
    B_pad0 = _round_up(max(B, 1), 16)
    tb = min(block_batch, B_pad0)
    if B_pad0 // tb < 2 and B_pad0 >= 32:
        tb = _round_up((B_pad0 + 1) // 2, 16)
    B_pad = _round_up(B_pad0, tb)

    # Pad + cast input to bf16 [B_pad, 8]; padded rows/cols are zero and sliced away below.
    x_pad = jnp.pad(x.astype(jnp.bfloat16),
                    ((0, B_pad - B), (0, IN_PAD - in_features)))

    out = pl.pallas_call(
        functools.partial(dqn_kernel, epilogue_dtype=ep),
        out_shape=jax.ShapeDtypeStruct((B_pad, out_pad), jnp.float32),
        grid=(B_pad // tb,),
        in_specs=[
            pl.BlockSpec((tb, IN_PAD), lambda i: (i, 0)),   # x tile, pipelined over batch
            pl.BlockSpec((8, 256), lambda i: (0, 0)),       # w1: VMEM-resident across steps
            pl.BlockSpec((512, 128), lambda i: (0, 0)),     # w2/w3/w4 slab: resident
            pl.BlockSpec((8, 256), lambda i: (0, 0)),       # bias slab: resident
        ],
        out_specs=pl.BlockSpec((tb, out_pad), lambda i: (i, 0)),
        compiler_params=pltpu.CompilerParams(
            dimension_semantics=("parallel",),              # megacore-shard batch on v7x
            vmem_limit_bytes=32 * 1024 * 1024),             # headroom for large tb (v5e default=16MiB)
    )(x_pad, w1p, wslab, bslab)

    # Padded rows and padded action columns (zeros, not -inf) MUST be sliced off here.
    return out[:B, :num_actions]


# ---------------------------------------------------------------------------
# Init + references
# ---------------------------------------------------------------------------
def init_params(key, in_features=4, num_actions=4):
    """PyTorch nn.Linear default-like init: U(-1/sqrt(fan_in), +1/sqrt(fan_in))."""
    dims = [in_features, 256, 128, 64, num_actions]
    params = {}
    keys = jax.random.split(key, 2 * (len(dims) - 1))
    for i in range(len(dims) - 1):
        fan_in, fan_out = dims[i], dims[i + 1]
        bound = 1.0 / (fan_in ** 0.5)
        params[f"w{i + 1}"] = jax.random.uniform(
            keys[2 * i], (fan_in, fan_out), minval=-bound, maxval=bound, dtype=jnp.float32)
        params[f"b{i + 1}"] = jax.random.uniform(
            keys[2 * i + 1], (1, fan_out), minval=-bound, maxval=bound, dtype=jnp.float32)
    return params


def reference_forward_f32(x, params):
    h = x.astype(jnp.float32)
    h = jnp.maximum(h @ params["w1"] + params["b1"], 0.0)
    h = jnp.maximum(h @ params["w2"] + params["b2"], 0.0)
    h = jnp.maximum(h @ params["w3"] + params["b3"], 0.0)
    return h @ params["w4"] + params["b4"]


def reference_forward_matched(x, params, epilogue_dtype):
    """Mirrors kernel numerics: bf16 MXU operands, f32 accumulation, epilogue-dtype
    bias-add/ReLU on hidden layers, f32 final bias add."""
    ep = epilogue_dtype

    def mm(a, w):
        return jnp.dot(a.astype(jnp.bfloat16), w.astype(jnp.bfloat16),
                       preferred_element_type=jnp.float32)

    h = x.astype(jnp.float32)
    for i in (1, 2, 3):
        h = mm(h, params[f"w{i}"]).astype(ep) + params[f"b{i}"].astype(ep)
        h = jnp.maximum(h, 0.0)
    return mm(h, params["w4"]) + params["b4"]


# ---------------------------------------------------------------------------
# Demo / self-test
# ---------------------------------------------------------------------------
if __name__ == "__main__":
    key = jax.random.PRNGKey(0)
    k_params, k_x1, k_x2 = jax.random.split(key, 3)

    in_features, num_actions = 4, 4
    params = init_params(k_params, in_features, num_actions)
    w1p, wslab, bslab = pack_params(params)   # packed ONCE per parameter set
    ep = _epilogue_dtype()

    # Small online-RL style batch (single grid step).
    x_small = jax.random.normal(k_x1, (8, in_features), dtype=jnp.float32)
    out_small = jax.block_until_ready(
        dqn_forward(x_small, w1p, wslab, bslab, num_actions=num_actions))
    assert out_small.shape == (8, num_actions)
    assert jnp.allclose(out_small, reference_forward_matched(x_small, params, ep),
                        atol=1e-3, rtol=1e-3)
    assert jnp.allclose(out_small, reference_forward_f32(x_small, params),
                        atol=1e-1, rtol=1e-1)

    # Replay-buffer style batch: exercises the >=2-step batch grid (tb=192, grid=2),
    # tile padding and VMEM-resident weights across grid steps.
    x_big = jax.random.normal(k_x2, (384, in_features), dtype=jnp.float32)
    out_big = jax.block_until_ready(
        dqn_forward(x_big, w1p, wslab, bslab, num_actions=num_actions))
    assert out_big.shape == (384, num_actions)
    assert jnp.allclose(out_big, reference_forward_matched(x_big, params, ep),
                        atol=1e-3, rtol=1e-3)
    assert jnp.allclose(out_big, reference_forward_f32(x_big, params),
                        atol=1e-1, rtol=1e-1)

    print("KERNEL_OK")
</pallas_src>

<mosaic_0001>
module attributes {stable_mosaic.version = 11 : i64} {
  func.func @dqn_kernel(%arg0: i32, %arg1: memref<16x8xbf16, #tpu.memory_space<vmem>>, %arg2: memref<8x256xbf16, #tpu.memory_space<vmem>>, %arg3: memref<512x128xbf16, #tpu.memory_space<vmem>>, %arg4: memref<8x256xf32, #tpu.memory_space<vmem>>, %arg5: memref<16x8xf32, #tpu.memory_space<vmem>>) attributes {dimension_semantics = [#tpu.dimension_semantics<parallel>], iteration_bounds = array<i64: 1>, scalar_prefetch = 0 : i64, scratch_operands = 0 : i64, tpu.core_type = #tpu.core_type<tc>, window_params = [{transform_indices = @transform_0, window_bounds = array<i64: 16, 8>}, {pipeline_mode = #tpu.pipeline_mode<synchronous>, transform_indices = @transform_1, window_bounds = array<i64: 8, 256>}, {pipeline_mode = #tpu.pipeline_mode<synchronous>, transform_indices = @transform_2, window_bounds = array<i64: 512, 128>}, {pipeline_mode = #tpu.pipeline_mode<synchronous>, transform_indices = @transform_3, window_bounds = array<i64: 8, 256>}, {transform_indices = @transform_4, window_bounds = array<i64: 16, 8>}]} {
    %c0 = arith.constant 0 : index
    %c0_0 = arith.constant 0 : index
    %0 = vector.load %arg4[%c0, %c0_0] : memref<8x256xf32, #tpu.memory_space<vmem>>, vector<8x256xf32>
    %1 = vector.extract_strided_slice %0 {offsets = [0, 0], sizes = [1, 256], strides = [1, 1]} : vector<8x256xf32> to vector<1x256xf32>
    %2 = vector.extract_strided_slice %0 {offsets = [1, 0], sizes = [1, 128], strides = [1, 1]} : vector<8x256xf32> to vector<1x128xf32>
    %3 = vector.extract_strided_slice %0 {offsets = [2, 0], sizes = [1, 128], strides = [1, 1]} : vector<8x256xf32> to vector<1x128xf32>
    %4 = vector.extract_strided_slice %0 {offsets = [3, 0], sizes = [1, 8], strides = [1, 1]} : vector<8x256xf32> to vector<1x8xf32>
    %c0_1 = arith.constant 0 : index
    %c0_2 = arith.constant 0 : index
    %5 = vector.load %arg1[%c0_1, %c0_2] : memref<16x8xbf16, #tpu.memory_space<vmem>>, vector<16x8xbf16>
    %c0_3 = arith.constant 0 : index
    %c0_4 = arith.constant 0 : index
    %6 = vector.load %arg2[%c0_3, %c0_4] : memref<8x256xbf16, #tpu.memory_space<vmem>>, vector<8x256xbf16>
    %cst = arith.constant dense<0.000000e+00> : vector<16x256xf32>
    %7 = tpu.matmul %5, %6, %cst {dimension_numbers = #tpu.dot_dimension_numbers<[1], [0], [0], [1], [0, 0, 1, 1], [], []>} : vector<16x8xbf16>, vector<8x256xbf16>, vector<16x256xf32> -> vector<16x256xf32>
    %8 = vector.broadcast %1 : vector<1x256xf32> to vector<16x256xf32>
    %9 = arith.addf %7, %8 : vector<16x256xf32>
    %cst_5 = arith.constant 0.000000e+00 : f32
    %10 = vector.broadcast %cst_5 : f32 to vector<16x256xf32>
    %11 = arith.maximumf %9, %10 : vector<16x256xf32>
    %12 = arith.truncf %11 : vector<16x256xf32> to vector<16x256xbf16>
    %c0_6 = arith.constant 0 : index
    %c0_7 = arith.constant 0 : index
    %13 = vector.load %arg3[%c0_6, %c0_7] : memref<512x128xbf16, #tpu.memory_space<vmem>>, vector<256x128xbf16>
    %cst_8 = arith.constant dense<0.000000e+00> : vector<16x128xf32>
    %14 = tpu.matmul %12, %13, %cst_8 {dimension_numbers = #tpu.dot_dimension_numbers<[1], [0], [0], [1], [0, 0, 1, 1], [], []>} : vector<16x256xbf16>, vector<256x128xbf16>, vector<16x128xf32> -> vector<16x128xf32>
    %15 = vector.broadcast %2 : vector<1x128xf32> to vector<16x128xf32>
    %16 = arith.addf %14, %15 : vector<16x128xf32>
    %cst_9 = arith.constant 0.000000e+00 : f32
    %17 = vector.broadcast %cst_9 : f32 to vector<16x128xf32>
    %18 = arith.maximumf %16, %17 : vector<16x128xf32>
    %19 = arith.truncf %18 : vector<16x128xf32> to vector<16x128xbf16>
    %c256 = arith.constant 256 : index
    %c0_10 = arith.constant 0 : index
    %20 = vector.load %arg3[%c256, %c0_10] : memref<512x128xbf16, #tpu.memory_space<vmem>>, vector<128x128xbf16>
    %cst_11 = arith.constant dense<0.000000e+00> : vector<16x128xf32>
    %21 = tpu.matmul %19, %20, %cst_11 {dimension_numbers = #tpu.dot_dimension_numbers<[1], [0], [0], [1], [0, 0, 1, 1], [], []>} : vector<16x128xbf16>, vector<128x128xbf16>, vector<16x128xf32> -> vector<16x128xf32>
    %22 = vector.broadcast %3 : vector<1x128xf32> to vector<16x128xf32>
    %23 = arith.addf %21, %22 : vector<16x128xf32>
    %cst_12 = arith.constant 0.000000e+00 : f32
    %24 = vector.broadcast %cst_12 : f32 to vector<16x128xf32>
    %25 = arith.maximumf %23, %24 : vector<16x128xf32>
    %26 = arith.truncf %25 : vector<16x128xf32> to vector<16x128xbf16>
    %c384 = arith.constant 384 : index
    %c0_13 = arith.constant 0 : index
    %27 = vector.load %arg3[%c384, %c0_13] : memref<512x128xbf16, #tpu.memory_space<vmem>>, vector<128x128xbf16>
    %cst_14 = arith.constant dense<0.000000e+00> : vector<16x128xf32>
    %28 = tpu.matmul %26, %27, %cst_14 {dimension_numbers = #tpu.dot_dimension_numbers<[1], [0], [0], [1], [0, 0, 1, 1], [], []>} : vector<16x128xbf16>, vector<128x128xbf16>, vector<16x128xf32> -> vector<16x128xf32>
    %29 = vector.extract_strided_slice %28 {offsets = [0, 0], sizes = [16, 8], strides = [1, 1]} : vector<16x128xf32> to vector<16x8xf32>
    %30 = vector.broadcast %4 : vector<1x8xf32> to vector<16x8xf32>
    %31 = arith.addf %29, %30 : vector<16x8xf32>
    %c0_15 = arith.constant 0 : index
    %c0_16 = arith.constant 0 : index
    %32 = vector.load %arg5[%c0_15, %c0_16] : memref<16x8xf32, #tpu.memory_space<vmem>>, vector<16x8xf32>
    tpu.vector_store %arg5[%c0_15, %c0_16], %31 {strides = array<i32>} : memref<16x8xf32, #tpu.memory_space<vmem>>, vector<16x8xf32>,
    return
  }
  func.func @transform_0(%arg0: i32) -> (i32, i32) {
    %c0_i32 = arith.constant 0 : i32
    %c0_i32_0 = arith.constant 0 : i32
    return %arg0, %c0_i32 : i32, i32
  }
  func.func @transform_1(%arg0: i32) -> (i32, i32) {
    %c0_i32 = arith.constant 0 : i32
    %c0_i32_0 = arith.constant 0 : i32
    %c0_i32_1 = arith.constant 0 : i32
    return %c0_i32, %c0_i32_0 : i32, i32
  }
  func.func @transform_2(%arg0: i32) -> (i32, i32) {
    %c0_i32 = arith.constant 0 : i32
    %c0_i32_0 = arith.constant 0 : i32
    %c0_i32_1 = arith.constant 0 : i32
    return %c0_i32, %c0_i32_0 : i32, i32
  }
  func.func @transform_3(%arg0: i32) -> (i32, i32) {
    %c0_i32 = arith.constant 0 : i32
    %c0_i32_0 = arith.constant 0 : i32
    %c0_i32_1 = arith.constant 0 : i32
    return %c0_i32, %c0_i32_0 : i32, i32
  }
  func.func @transform_4(%arg0: i32) -> (i32, i32) {
    %c0_i32 = arith.constant 0 : i32
    %c0_i32_0 = arith.constant 0 : i32
    return %arg0, %c0_i32 : i32, i32
  }
}

</mosaic_0001>

<llo_original>
// kernel: dqn_forward.1
$region0: #{dqn_forward.1}
  #allocation0 [shape = 'u32[]', space=smem, size = 0x4, offset = 0x4, fixed_abs, tag = 'smem constant byte address 0x4 - core index']
  #allocation1 [shape = 'u32[144,128]{1,0:T(1,128)}', space=vmem, size = 0x12000, scoped, tag = 'internal scratch']
  %s0 = inlined_call_operand.vmem [shape: bf16[16,8], index: 0, kind: input, shape index: {}]
  %s1 = inlined_call_operand.vmem [shape: bf16[8,256], index: 1, kind: input, shape index: {}]
  %s2 = inlined_call_operand.hbm [shape: bf16[512,128], index: 2, kind: input, shape index: {}]
  %s3 = inlined_call_operand.vmem [shape: f32[8,256], index: 3, kind: input, shape index: {}]
  %s4 = inlined_call_operand.vmem [shape: f32[16,8], index: 4, kind: output, shape index: {}]
  %s5 = sld [smem:[#allocation0]]
  $region30: #{dqn_forward.1} parent=0
    _
  %s7 = ssub.s32 1, %s5
  %s8 = scalar_select 0, %s7, %s5
  $region1: #{dqn_forward.1} parent=0
    #allocation2 [shape = 'u8[131072]{0}', space=vmem, size = 0x20000, scoped, tag = 'input window, operand 2, single buffered']
    #allocation3 [shape = 's32[1]{0}', space=sflag, size = 0x4, scoped, tag = 'scoped memory for dqn_forward.1']
    %9 = vsyncpa [#allocation3], 0
    // Predicated region
    $region2: #{dqn_forward.1} parent=1 // pred_check
      _
    $region3: #{dqn_forward.1} parent=1 // pred_check_branch
      %11 = sbr.rel (0) target = $region5
    $region4: #{dqn_forward.1} parent=1 // pred_region
      _
    $region5: #{dqn_forward.1} parent=1 // pred_fallthru
      _
    // Predicated region
    $region6: #{dqn_forward.1} parent=1 // pred_check
      _
    $region7: #{dqn_forward.1} parent=1 // pred_check_branch
      %13 = sbr.rel (0) target = $region9
    $region8: #{dqn_forward.1} parent=1 // pred_region
      _
    $region9: #{dqn_forward.1} parent=1 // pred_fallthru
      _
    // Predicated region
    $region10: #{dqn_forward.1} parent=1 // pred_check
      _
    $region11: #{dqn_forward.1} parent=1 // pred_check_branch
      %15 = sbr.rel (0) target = $region13
    $region12: #{dqn_forward.1} parent=1 // pred_region
      %s17 = ssub.s32 4096, 4096
      %18 = vsyncadd [#allocation3], %s17
      %s19 = sshll.u32 [#allocation2], 4
      %s20 = int_to_ptr.vmem [resolvable:$true] %s19
      %25 = dma.hbm_to_vmem [thread:$0]  %s2, 4096, %s20, [#allocation3], 64, 64, 4
    $region13: #{dqn_forward.1} parent=1 // pred_fallthru
      _
    // Predicated region
    $region14: #{dqn_forward.1} parent=1 // pred_check
      _
    $region15: #{dqn_forward.1} parent=1 // pred_check_branch
      %27 = sbr.rel (0) target = $region17
    $region16: #{dqn_forward.1} parent=1 // pred_region
      _
    $region17: #{dqn_forward.1} parent=1 // pred_fallthru
      _
    // Predicated region
    $region18: #{dqn_forward.1} parent=1 // pred_check
      _
    $region19: #{dqn_forward.1} parent=1 // pred_check_branch
      %29 = sbr.rel (0) target = $region21
    $region20: #{dqn_forward.1} parent=1 // pred_region
      %30 = dma.done [#allocation3], 4096
    $region21: #{dqn_forward.1} parent=1 // pred_fallthru
      _
    %v32 = vld [vmem:[%s3] sm:$0xff]
    %v33 = vld [vmem:[%s3 + $0x8] sm:$0xff]
    %v34 = vld [vmem:[%s0] sm:$0xf]
    %v35 = vld [vmem:[%s0 + $0x4] sm:$0xf]
    %v36 = vld [vmem:[%s1] sm:$0xff]
    %v37 = vlaneseq
    %v38 = vshrl.u32 %v37, 7
    %v39 = vsub.s32 0, %v38
    %v40 = vrot.slane %v32, %v39
    %v41 = vlaneseq
    %v42 = vshrl.u32 %v41, 7
    %v43 = vsub.s32 0, %v42
    %v44 = vrot.slane %v33, %v43
    %v47 = vunpack.c.l.b16 %v34
    %v48 = vunpack.c.l.b16 %v35
    %v49 = vpack.c.b16 %v48, %v47
    %v51 = vunpack.c.l.b16 %v36
    %v52 = vunpack.c.h.b16 %v36
    %v53 = vpack.c.b16 %v51, %v51
    %v54 = vpack.c.b16 %v52, %v52
    %vm55 = vcmask 64512
    %v57 = vsel %vm55, %v49, 0
    %vm59 = vcmask 1043456
    %v61 = vsel %vm59, %v53, 0
    %v64 = vsel %vm59, %v54, 0
    %66 = vmatprep.subr.bf16.mxu0 0
    %67 = vmatpush1.bf16.msra.mxu0 0
    %68 = vmatprep.subr.bf16.mxu0 0
    %69 = vmatpush1.bf16.msra.mxu0 0
    %70 = vmatprep.subr.bf16.mxu0 0
    %71 = vmatpush1.bf16.msra.mxu0 0
    %72 = vmatprep.subr.bf16.mxu0 0
    %73 = vmatpush1.bf16.msra.mxu0 0
    %74 = vmatprep.subr.bf16.mxu0 0
    %75 = vmatpush1.bf16.msra.mxu0 0
    %76 = vmatprep.subr.bf16.mxu0 0
    %77 = vmatpush1.bf16.msra.mxu0 0
    %78 = vmatprep.subr.bf16.mxu0 0
    %79 = vmatpush1.bf16.msra.mxu0 0
    %80 = vmatprep.subr.bf16.mxu0 %v64
    %81 = vmatpush1.bf16.msra.mxu0 %v61
    %82 = vmatprep.subr.bf16.mxu0 0
    %83 = vmatpush2.bf16.msra.mxu0 0
    %84 = vmatprep.subr.bf16.mxu0 0
    %85 = vmatpush2.bf16.msra.mxu0 0
    %86 = vmatprep.subr.bf16.mxu0 0
    %87 = vmatpush2.bf16.msra.mxu0 0
    %88 = vmatprep.subr.bf16.mxu0 0
    %89 = vmatpush2.bf16.msra.mxu0 0
    %90 = vmatprep.subr.bf16.mxu0 0
    %91 = vmatpush2.bf16.msra.mxu0 0
    %92 = vmatprep.subr.bf16.mxu0 0
    %93 = vmatpush2.bf16.msra.mxu0 0
    %94 = vmatprep.subr.bf16.mxu0 0
    %95 = vmatpush2.bf16.msra.mxu0 0
    %96 = vmatprep.subr.bf16.mxu0 0
    %97 = vmatpush2.bf16.msra.mxu0 0
    %98 = vmatprep.mubr.bf16.mxu0 0
    %99 = vmatmul.mubr.bf16.gmra.mxu0 %v57
    %v100 = vpop.f32.mrf.mxu0
    %v101 = vadd.f32 %v40, %v100
    %v102 = vpop.f32.mrf.mxu0
    %v103 = vadd.f32 %v44, %v102
    %v104 = vpop.f32.mrf.mxu0
    %v105 = vadd.f32 %v40, %v104
    %v106 = vpop.f32.mrf.mxu0
    %v107 = vadd.f32 %v44, %v106
    %108 = vdwg.mxu0
    %v109 = vmax.f32 %v101, 0.0
    %v110 = vmax.f32 %v103, 0.0
    %v111 = vmax.f32 %v105, 0.0
    %v112 = vmax.f32 %v107, 0.0
    %v113 = vpack.c.bf16 %v111, %v109
    %v114 = vpack.c.bf16 %v112, %v110
    %v115 = vld [vmem:[#allocation2] sm:$0xf]
    %v116 = vld [vmem:[#allocation2 + $0x4] sm:$0xf]
    %v117 = vld [vmem:[#allocation2 + $0x8] sm:$0xf]
    %v118 = vld [vmem:[#allocation2 + $0xc] sm:$0xf]
    %v119 = vld [vmem:[#allocation2 + $0x10] sm:$0xf]
    %v120 = vld [vmem:[#allocation2 + $0x14] sm:$0xf]
    %v121 = vld [vmem:[#allocation2 + $0x18] sm:$0xf]
    %v122 = vld [vmem:[#allocation2 + $0x1c] sm:$0xf]
    %v123 = vld [vmem:[#allocation2 + $0x20] sm:$0xf]
    %v124 = vld [vmem:[#allocation2 + $0x24] sm:$0xf]
    %v125 = vld [vmem:[#allocation2 + $0x28] sm:$0xf]
    %v126 = vld [vmem:[#allocation2 + $0x2c] sm:$0xf]
    %v127 = vld [vmem:[#allocation2 + $0x30] sm:$0xf]
    %v128 = vld [vmem:[#allocation2 + $0x34] sm:$0xf]
    %v129 = vld [vmem:[#allocation2 + $0x38] sm:$0xf]
    %v130 = vld [vmem:[#allocation2 + $0x3c] sm:$0xf]
    %v131 = vld [vmem:[#allocation2 + $0x40] sm:$0xf]
    %v132 = vld [vmem:[#allocation2 + $0x44] sm:$0xf]
    %v133 = vld [vmem:[#allocation2 + $0x48] sm:$0xf]
    %v134 = vld [vmem:[#allocation2 + $0x4c] sm:$0xf]
    %v135 = vld [vmem:[#allocation2 + $0x50] sm:$0xf]
    %v136 = vld [vmem:[#allocation2 + $0x54] sm:$0xf]
    %v137 = vld [vmem:[#allocation2 + $0x58] sm:$0xf]
    %v138 = vld [vmem:[#allocation2 + $0x5c] sm:$0xf]
    %v139 = vld [vmem:[#allocation2 + $0x60] sm:$0xf]
    %v140 = vld [vmem:[#allocation2 + $0x64] sm:$0xf]
    %v141 = vld [vmem:[#allocation2 + $0x68] sm:$0xf]
    %v142 = vld [vmem:[#allocation2 + $0x6c] sm:$0xf]
    %v143 = vld [vmem:[#allocation2 + $0x70] sm:$0xf]
    %v144 = vld [vmem:[#allocation2 + $0x74] sm:$0xf]
    %v145 = vld [vmem:[#allocation2 + $0x78] sm:$0xf]
    %v146 = vld [vmem:[#allocation2 + $0x7c] sm:$0xf]
    %v147 = vlaneseq
    %v148 = vshrl.u32 %v147, 7
    %v149 = vsub.s32 1, %v148
    %v150 = vrot.slane %v32, %v149
    %v183 = vunpack.c.l.b16 %v115
    %v184 = vunpack.c.l.b16 %v116
    %v185 = vunpack.c.l.b16 %v117
    %v186 = vunpack.c.l.b16 %v118
    %v187 = vunpack.c.l.b16 %v119
    %v188 = vunpack.c.l.b16 %v120
    %v189 = vunpack.c.l.b16 %v121
    %v190 = vunpack.c.l.b16 %v122
    %v191 = vunpack.c.l.b16 %v123
    %v192 = vunpack.c.l.b16 %v124
    %v193 = vunpack.c.l.b16 %v125
    %v194 = vunpack.c.l.b16 %v126
    %v195 = vunpack.c.l.b16 %v127
    %v196 = vunpack.c.l.b16 %v128
    %v197 = vunpack.c.l.b16 %v129
    %v198 = vunpack.c.l.b16 %v130
    %v199 = vunpack.c.l.b16 %v131
    %v200 = vunpack.c.l.b16 %v132
    %v201 = vunpack.c.l.b16 %v133
    %v202 = vunpack.c.l.b16 %v134
    %v203 = vunpack.c.l.b16 %v135
    %v204 = vunpack.c.l.b16 %v136
    %v205 = vunpack.c.l.b16 %v137
    %v206 = vunpack.c.l.b16 %v138
    %v207 = vunpack.c.l.b16 %v139
    %v208 = vunpack.c.l.b16 %v140
    %v209 = vunpack.c.l.b16 %v141
    %v210 = vunpack.c.l.b16 %v142
    %v211 = vunpack.c.l.b16 %v143
    %v212 = vunpack.c.l.b16 %v144
    %v213 = vunpack.c.l.b16 %v145
    %v214 = vunpack.c.l.b16 %v146
    %v215 = vpack.c.b16 %v184, %v183
    %v216 = vpack.c.b16 %v186, %v185
    %v217 = vpack.c.b16 %v188, %v187
    %v218 = vpack.c.b16 %v190, %v189
    %v219 = vpack.c.b16 %v192, %v191
    %v220 = vpack.c.b16 %v194, %v193
    %v221 = vpack.c.b16 %v196, %v195
    %v222 = vpack.c.b16 %v198, %v197
    %v223 = vpack.c.b16 %v200, %v199
    %v224 = vpack.c.b16 %v202, %v201
    %v225 = vpack.c.b16 %v204, %v203
    %v226 = vpack.c.b16 %v206, %v205
    %v227 = vpack.c.b16 %v208, %v207
    %v228 = vpack.c.b16 %v210, %v209
    %v229 = vpack.c.b16 %v212, %v211
    %v230 = vpack.c.b16 %v214, %v213
    %247 = vmatprep.subr.bf16.mxu0 0
    %248 = vmatpush1.bf16.msra.mxu0 %v222
    %249 = vmatprep.subr.bf16.mxu0 0
    %250 = vmatpush1.bf16.msra.mxu0 %v221
    %251 = vmatprep.subr.bf16.mxu0 0
    %252 = vmatpush1.bf16.msra.mxu0 %v220
    %253 = vmatprep.subr.bf16.mxu0 0
    %254 = vmatpush1.bf16.msra.mxu0 %v219
    %255 = vmatprep.subr.bf16.mxu0 0
    %256 = vmatpush1.bf16.msra.mxu0 %v218
    %257 = vmatprep.subr.bf16.mxu0 0
    %258 = vmatpush1.bf16.msra.mxu0 %v217
    %259 = vmatprep.subr.bf16.mxu0 0
    %260 = vmatpush1.bf16.msra.mxu0 %v216
    %261 = vmatprep.subr.bf16.mxu0 0
    %262 = vmatpush1.bf16.msra.mxu0 %v215
    %263 = vmatprep.subr.bf16.mxu0 0
    %264 = vmatpush2.bf16.msra.mxu0 %v230
    %265 = vmatprep.subr.bf16.mxu0 0
    %266 = vmatpush2.bf16.msra.mxu0 %v229
    %267 = vmatprep.subr.bf16.mxu0 0
    %268 = vmatpush2.bf16.msra.mxu0 %v228
    %269 = vmatprep.subr.bf16.mxu0 0
    %270 = vmatpush2.bf16.msra.mxu0 %v227
    %271 = vmatprep.subr.bf16.mxu0 0
    %272 = vmatpush2.bf16.msra.mxu0 %v226
    %273 = vmatprep.subr.bf16.mxu0 0
    %274 = vmatpush2.bf16.msra.mxu0 %v225
    %275 = vmatprep.subr.bf16.mxu0 0
    %276 = vmatpush2.bf16.msra.mxu0 %v224
    %277 = vmatprep.subr.bf16.mxu0 0
    %278 = vmatpush2.bf16.msra.mxu0 %v223
    %279 = vmatprep.mubr.bf16.mxu0 %v114
    %280 = vmatmul.mubr.bf16.gmra.mxu0 %v113
    %v281 = vpop.f32.mrf.mxu0
    %v282 = vadd.f32 %v150, %v281
    %v283 = vpop.f32.mrf.mxu0
    %v284 = vpop.f32.mrf.mxu0
    %v285 = vadd.f32 %v150, %v284
    %v286 = vpop.f32.mrf.mxu0
    %287 = vdwg.mxu0
    %v288 = vmax.f32 %v282, 0.0
    %v289 = vmax.f32 %v285, 0.0
    %v290 = vpack.c.bf16 %v289, %v288
    %v291 = vld [vmem:[#allocation2 + $0x80] sm:$0xf]
    %v292 = vld [vmem:[#allocation2 + $0x84] sm:$0xf]
    %v293 = vld [vmem:[#allocation2 + $0x88] sm:$0xf]
    %v294 = vld [vmem:[#allocation2 + $0x8c] sm:$0xf]
    %v295 = vld [vmem:[#allocation2 + $0x90] sm:$0xf]
    %v296 = vld [vmem:[#allocation2 + $0x94] sm:$0xf]
    %v297 = vld [vmem:[#allocation2 + $0x98] sm:$0xf]
    %v298 = vld [vmem:[#allocation2 + $0x9c] sm:$0xf]
    %v299 = vld [vmem:[#allocation2 + $0xa0] sm:$0xf]
    %v300 = vld [vmem:[#allocation2 + $0xa4] sm:$0xf]
    %v301 = vld [vmem:[#allocation2 + $0xa8] sm:$0xf]
    %v302 = vld [vmem:[#allocation2 + $0xac] sm:$0xf]
    %v303 = vld [vmem:[#allocation2 + $0xb0] sm:$0xf]
    %v304 = vld [vmem:[#allocation2 + $0xb4] sm:$0xf]
    %v305 = vld [vmem:[#allocation2 + $0xb8] sm:$0xf]
    %v306 = vld [vmem:[#allocation2 + $0xbc] sm:$0xf]
    %v307 = vlaneseq
    %v308 = vshrl.u32 %v307, 7
    %v309 = vsub.s32 2, %v308
    %v310 = vrot.slane %v32, %v309
    %v327 = vunpack.c.l.b16 %v291
    %v328 = vunpack.c.l.b16 %v292
    %v329 = vunpack.c.l.b16 %v293
    %v330 = vunpack.c.l.b16 %v294
    %v331 = vunpack.c.l.b16 %v295
    %v332 = vunpack.c.l.b16 %v296
    %v333 = vunpack.c.l.b16 %v297
    %v334 = vunpack.c.l.b16 %v298
    %v335 = vunpack.c.l.b16 %v299
    %v336 = vunpack.c.l.b16 %v300
    %v337 = vunpack.c.l.b16 %v301
    %v338 = vunpack.c.l.b16 %v302
    %v339 = vunpack.c.l.b16 %v303
    %v340 = vunpack.c.l.b16 %v304
    %v341 = vunpack.c.l.b16 %v305
    %v342 = vunpack.c.l.b16 %v306
    %v343 = vpack.c.b16 %v328, %v327
    %v344 = vpack.c.b16 %v330, %v329
    %v345 = vpack.c.b16 %v332, %v331
    %v346 = vpack.c.b16 %v334, %v333
    %v347 = vpack.c.b16 %v336, %v335
    %v348 = vpack.c.b16 %v338, %v337
    %v349 = vpack.c.b16 %v340, %v339
    %v350 = vpack.c.b16 %v342, %v341
    %359 = vmatprep.subr.bf16.mxu0 0
    %360 = vmatpush1.bf16.msra.mxu0 %v350
    %361 = vmatprep.subr.bf16.mxu0 0
    %362 = vmatpush1.bf16.msra.mxu0 %v349
    %363 = vmatprep.subr.bf16.mxu0 0
    %364 = vmatpush1.bf16.msra.mxu0 %v348
    %365 = vmatprep.subr.bf16.mxu0 0
    %366 = vmatpush1.bf16.msra.mxu0 %v347
    %367 = vmatprep.subr.bf16.mxu0 0
    %368 = vmatpush1.bf16.msra.mxu0 %v346
    %369 = vmatprep.subr.bf16.mxu0 0
    %370 = vmatpush1.bf16.msra.mxu0 %v345
    %371 = vmatprep.subr.bf16.mxu0 0
    %372 = vmatpush1.bf16.msra.mxu0 %v344
    %373 = vmatprep.subr.bf16.mxu0 0
    %374 = vmatpush1.bf16.msra.mxu0 %v343
    %375 = vmatprep.subr.bf16.mxu0 0
    %376 = vmatpush2.bf16.msra.mxu0 0
    %377 = vmatprep.subr.bf16.mxu0 0
    %378 = vmatpush2.bf16.msra.mxu0 0
    %379 = vmatprep.subr.bf16.mxu0 0
    %380 = vmatpush2.bf16.msra.mxu0 0
    %381 = vmatprep.subr.bf16.mxu0 0
    %382 = vmatpush2.bf16.msra.mxu0 0
    %383 = vmatprep.subr.bf16.mxu0 0
    %384 = vmatpush2.bf16.msra.mxu0 0
    %385 = vmatprep.subr.bf16.mxu0 0
    %386 = vmatpush2.bf16.msra.mxu0 0
    %387 = vmatprep.subr.bf16.mxu0 0
    %388 = vmatpush2.bf16.msra.mxu0 0
    %389 = vmatprep.subr.bf16.mxu0 0
    %390 = vmatpush2.bf16.msra.mxu0 0
    %391 = vmatprep.mubr.bf16.mxu0 0
    %392 = vmatmul.mubr.bf16.gmra.mxu0 %v290
    %v393 = vpop.f32.mrf.mxu0
    %v394 = vadd.f32 %v310, %v393
    %v395 = vpop.f32.mrf.mxu0
    %v396 = vpop.f32.mrf.mxu0
    %v397 = vadd.f32 %v310, %v396
    %v398 = vpop.f32.mrf.mxu0
    %399 = vdwg.mxu0
    %v400 = vmax.f32 %v394, 0.0
    %v401 = vmax.f32 %v397, 0.0
    %v402 = vpack.c.bf16 %v401, %v400
    %v403 = vld [vmem:[#allocation2 + $0xc0] sm:$0xf]
    %v404 = vld [vmem:[#allocation2 + $0xc4] sm:$0xf]
    %v405 = vld [vmem:[#allocation2 + $0xc8] sm:$0xf]
    %v406 = vld [vmem:[#allocation2 + $0xcc] sm:$0xf]
    %v407 = vld [vmem:[#allocation2 + $0xd0] sm:$0xf]
    %v408 = vld [vmem:[#allocation2 + $0xd4] sm:$0xf]
    %v409 = vld [vmem:[#allocation2 + $0xd8] sm:$0xf]
    %v410 = vld [vmem:[#allocation2 + $0xdc] sm:$0xf]
    %v411 = vld [vmem:[#allocation2 + $0xe0] sm:$0xf]
    %v412 = vld [vmem:[#allocation2 + $0xe4] sm:$0xf]
    %v413 = vld [vmem:[#allocation2 + $0xe8] sm:$0xf]
    %v414 = vld [vmem:[#allocation2 + $0xec] sm:$0xf]
    %v415 = vld [vmem:[#allocation2 + $0xf0] sm:$0xf]
    %v416 = vld [vmem:[#allocation2 + $0xf4] sm:$0xf]
    %v417 = vld [vmem:[#allocation2 + $0xf8] sm:$0xf]
    %v418 = vld [vmem:[#allocation2 + $0xfc] sm:$0xf]
    %v435 = vunpack.c.l.b16 %v403
    %v436 = vunpack.c.l.b16 %v404
    %v437 = vunpack.c.l.b16 %v405
    %v438 = vunpack.c.l.b16 %v406
    %v439 = vunpack.c.l.b16 %v407
    %v440 = vunpack.c.l.b16 %v408
    %v441 = vunpack.c.l.b16 %v409
    %v442 = vunpack.c.l.b16 %v410
    %v443 = vunpack.c.l.b16 %v411
    %v444 = vunpack.c.l.b16 %v412
    %v445 = vunpack.c.l.b16 %v413
    %v446 = vunpack.c.l.b16 %v414
    %v447 = vunpack.c.l.b16 %v415
    %v448 = vunpack.c.l.b16 %v416
    %v449 = vunpack.c.l.b16 %v417
    %v450 = vunpack.c.l.b16 %v418
    %v451 = vpack.c.b16 %v436, %v435
    %v452 = vpack.c.b16 %v438, %v437
    %v453 = vpack.c.b16 %v440, %v439
    %v454 = vpack.c.b16 %v442, %v441
    %v455 = vpack.c.b16 %v444, %v443
    %v456 = vpack.c.b16 %v446, %v445
    %v457 = vpack.c.b16 %v448, %v447
    %v458 = vpack.c.b16 %v450, %v449
    %467 = vmatprep.subr.bf16.mxu0 0
    %468 = vmatpush1.bf16.msra.mxu0 %v458
    %469 = vmatprep.subr.bf16.mxu0 0
    %470 = vmatpush1.bf16.msra.mxu0 %v457
    %471 = vmatprep.subr.bf16.mxu0 0
    %472 = vmatpush1.bf16.msra.mxu0 %v456
    %473 = vmatprep.subr.bf16.mxu0 0
    %474 = vmatpush1.bf16.msra.mxu0 %v455
    %475 = vmatprep.subr.bf16.mxu0 0
    %476 = vmatpush1.bf16.msra.mxu0 %v454
    %477 = vmatprep.subr.bf16.mxu0 0
    %478 = vmatpush1.bf16.msra.mxu0 %v453
    %479 = vmatprep.subr.bf16.mxu0 0
    %480 = vmatpush1.bf16.msra.mxu0 %v452
    %481 = vmatprep.subr.bf16.mxu0 0
    %482 = vmatpush1.bf16.msra.mxu0 %v451
    %483 = vmatprep.subr.bf16.mxu0 0
    %484 = vmatpush2.bf16.msra.mxu0 0
    %485 = vmatprep.subr.bf16.mxu0 0
    %486 = vmatpush2.bf16.msra.mxu0 0
    %487 = vmatprep.subr.bf16.mxu0 0
    %488 = vmatpush2.bf16.msra.mxu0 0
    %489 = vmatprep.subr.bf16.mxu0 0
    %490 = vmatpush2.bf16.msra.mxu0 0
    %491 = vmatprep.subr.bf16.mxu0 0
    %492 = vmatpush2.bf16.msra.mxu0 0
    %493 = vmatprep.subr.bf16.mxu0 0
    %494 = vmatpush2.bf16.msra.mxu0 0
    %495 = vmatprep.subr.bf16.mxu0 0
    %496 = vmatpush2.bf16.msra.mxu0 0
    %497 = vmatprep.subr.bf16.mxu0 0
    %498 = vmatpush2.bf16.msra.mxu0 0
    %499 = vmatprep.mubr.bf16.mxu0 0
    %500 = vmatmul.mubr.bf16.gmra.mxu0 %v402
    %v501 = vpop.f32.mrf.mxu0
    %v502 = vadd.f32 0.0, %v501
    %v503 = vpop.f32.mrf.mxu0
    %v504 = vpop.f32.mrf.mxu0
    %v505 = vadd.f32 0.0, %v504
    %v506 = vpop.f32.mrf.mxu0
    %507 = vdwg.mxu0
    %v508 = vlaneseq
    %v509 = vshrl.u32 %v508, 7
    %v510 = vsub.s32 3, %v509
    %v511 = vrot.slane %v32, %v510
    %v512 = vadd.f32 %v502, %v511
    %v513 = vadd.f32 %v505, %v511
    %514 = vst.msk [vmem:[%s4] sm:$0xff] %vm55, %v512
    %515 = vst.msk [vmem:[%s4 + $0x8] sm:$0xff] %vm55, %v513
    // Predicated region
    $region22: #{dqn_forward.1} parent=1 // pred_check
      _
    $region23: #{dqn_forward.1} parent=1 // pred_check_branch
      %517 = sbr.rel (0) target = $region25
    $region24: #{dqn_forward.1} parent=1 // pred_region
      _
    $region25: #{dqn_forward.1} parent=1 // pred_fallthru
      _
    // Predicated region
    $region26: #{dqn_forward.1} parent=1 // pred_check
      _
    $region27: #{dqn_forward.1} parent=1 // pred_check_branch
      %519 = sbr.rel (0) target = $region29
    $region28: #{dqn_forward.1} parent=1 // pred_region
      _
    $region29: #{dqn_forward.1} parent=1 // pred_fallthru
      _
    %520 = vsyncpa [#allocation3], 1

</llo_original>
